<compile_context>
chip_gen: v7x
topology: tpu7x:2x2x1
jax: 0.10.0
libtpu: 0.0.40
codegen_flags: <defaults>
</compile_context>

<pallas_src>
import functools

import jax
import jax.numpy as jnp
from jax.experimental import pallas as pl
from jax.experimental.pallas import tpu as pltpu


def _round_up(n, m):
    return ((n + m - 1) // m) * m


def _mlp4_kernel(x_ref, wsq_ref, bsq_ref, w4_ref, b4_ref, o_ref):
    """Fused 4-layer MLP head: all matmuls + bias adds + ReLUs in one pass.

    x_ref   : (TB, D)      current batch tile
    wsq_ref : (3, D, D)    fc1..fc3 weights, pre-transposed, resident in VMEM
    bsq_ref : (3, 1, D)    fc1..fc3 biases
    w4_ref  : (D, O_pad)   fc4 weight, lane-padded to a multiple of 128
    b4_ref  : (1, O_pad)   fc4 bias, lane-padded
    o_ref   : (TB, O_pad)  lane-dense output tile (padded cols sliced outside)
    """
    h = x_ref[...]
    # fc1..fc3 + ReLU (trace-time unrolled; static first-axis indexing)
    for l in range(3):
        h = jnp.dot(h, wsq_ref[l], preferred_element_type=jnp.float32) + bsq_ref[l]
        h = jnp.maximum(h, 0.0)
    # fc4 (no activation)
    h = jnp.dot(h, w4_ref[...], preferred_element_type=jnp.float32) + b4_ref[...]
    o_ref[...] = h.astype(o_ref.dtype)


@functools.partial(jax.jit, static_argnames=("block_b", "out_dim"))
def _mlp4_forward(x, wsq, bsq, w4, b4, *, block_b, out_dim):
    """Single-dispatch forward: pad batch -> fused Pallas MLP -> slice."""
    B, D = x.shape
    O_pad = w4.shape[1]

    B_pad = _round_up(B, block_b)
    if B_pad != B:
        x = jnp.pad(x, ((0, B_pad - B), (0, 0)))
    grid_steps = B_pad // block_b

    def full2(_i):
        return (0, 0)

    def full3(_i):
        return (0, 0, 0)

    # Megacore sharding only pays off with several steps per core (v7x);
    # tiny grids run single-TC. On v5e/v6e this choice is a no-op.
    semantics = ("parallel",) if grid_steps >= 4 else ("arbitrary",)

    itemsize = jnp.dtype(x.dtype).itemsize
    flops = 2 * B_pad * (3 * D * D + D * O_pad)
    bytes_accessed = itemsize * (
        B_pad * D                    # x
        + 3 * D * D + D * O_pad      # weights (resident; counted once)
        + 3 * D + O_pad              # biases
        + B_pad * O_pad              # output
    )

    out = pl.pallas_call(
        _mlp4_kernel,
        out_shape=jax.ShapeDtypeStruct((B_pad, O_pad), x.dtype),
        grid_spec=pltpu.PrefetchScalarGridSpec(
            num_scalar_prefetch=0,
            grid=(grid_steps,),
            in_specs=[
                pl.BlockSpec((block_b, D), lambda i: (i, 0)),   # x tile
                pl.BlockSpec((3, D, D), full3),                 # fc1..fc3 W
                pl.BlockSpec((3, 1, D), full3),                 # fc1..fc3 b
                pl.BlockSpec((D, O_pad), full2),                # fc4 W (lane-padded)
                pl.BlockSpec((1, O_pad), full2),                # fc4 b (lane-padded)
            ],
            out_specs=pl.BlockSpec((block_b, O_pad), lambda i: (i, 0)),
        ),
        compiler_params=pltpu.CompilerParams(
            dimension_semantics=semantics,
        ),
        cost_estimate=pl.CostEstimate(
            flops=flops, transcendentals=0, bytes_accessed=bytes_accessed),
    )(x, wsq, bsq, w4, b4)

    return out[:B, :out_dim]


def prepare_params(params, lane=128):
    """One-time packing/padding (outside the hot path):
      * stack fc1..fc3 weights/biases into single arrays (fewer DMAs per step)
      * zero-pad fc4 out-features to a multiple of 128 for lane-dense stores
    """
    D, O = params["w4"].shape
    O_pad = _round_up(O, lane)
    wsq = jnp.stack([params["w1"], params["w2"], params["w3"]], axis=0)
    bsq = jnp.stack([params["b1"], params["b2"], params["b3"]], axis=0)
    w4 = jnp.pad(params["w4"], ((0, 0), (0, O_pad - O)))
    b4 = jnp.pad(params["b4"], ((0, 0), (0, O_pad - O)))
    return {"wsq": wsq, "bsq": bsq, "w4": w4, "b4": b4, "out_dim": int(O)}


def classifier_head_layer_4_pallas(x, prepared):
    """x: (B, in_dim). prepared: output of prepare_params(). Any batch size."""
    B = x.shape[0]
    # One grid step for small/medium batches (overhead-bound: fewer steps ==
    # less latency); 256-row tiles for large batches to amortize per-step cost.
    if B <= 512:
        block_b = max(_round_up(B, 8), 8)
    else:
        block_b = 256
    return _mlp4_forward(
        x, prepared["wsq"], prepared["bsq"], prepared["w4"], prepared["b4"],
        block_b=block_b, out_dim=prepared["out_dim"])


def init_params(key, in_dim, out_dim, dtype=jnp.float32):
    """Deterministic init mimicking nn.Linear default (uniform +-1/sqrt(fan_in)).

    Weights are stored transposed relative to PyTorch: (in_features, out_features).
    """
    keys = jax.random.split(key, 8)
    params = {}
    dims = [(in_dim, in_dim), (in_dim, in_dim), (in_dim, in_dim), (in_dim, out_dim)]
    for idx, (fan_in, fan_out) in enumerate(dims, start=1):
        bound = 1.0 / jnp.sqrt(jnp.asarray(fan_in, dtype))
        wk, bk = keys[2 * (idx - 1)], keys[2 * (idx - 1) + 1]
        params[f"w{idx}"] = jax.random.uniform(
            wk, (fan_in, fan_out), dtype, minval=-bound, maxval=bound)
        params[f"b{idx}"] = jax.random.uniform(
            bk, (1, fan_out), dtype, minval=-bound, maxval=bound)
    return params


def reference_forward(x, params):
    """Pure-JAX reference matching the PyTorch module exactly."""
    h = jnp.maximum(x @ params["w1"] + params["b1"], 0.0)
    h = jnp.maximum(h @ params["w2"] + params["b2"], 0.0)
    h = jnp.maximum(h @ params["w3"] + params["b3"], 0.0)
    return h @ params["w4"] + params["b4"]


if __name__ == "__main__":
    key = jax.random.PRNGKey(0)
    k_x, k_p = jax.random.split(key)

    B, in_dim, out_dim = 16, 32, 8  # small shapes consistent with the module
    x = jax.random.normal(k_x, (B, in_dim), jnp.float32)
    params = init_params(k_p, in_dim, out_dim)
    prepared = prepare_params(params)

    out = classifier_head_layer_4_pallas(x, prepared)
    out = jax.block_until_ready(out)

    ref = reference_forward(x, params)
    assert out.shape == (B, out_dim)
    assert jnp.allclose(out, ref, atol=1e-4, rtol=1e-4), "mismatch vs reference"

    # Also exercise a non-tile-aligned batch to validate the padding path.
    x2 = jax.random.normal(k_x, (13, in_dim), jnp.float32)
    out2 = jax.block_until_ready(classifier_head_layer_4_pallas(x2, prepared))
    assert out2.shape == (13, out_dim)
    assert jnp.allclose(out2, reference_forward(x2, params), atol=1e-4, rtol=1e-4)

    print("KERNEL_OK")
</pallas_src>

<mosaic_0001>
module attributes {stable_mosaic.version = 11 : i64} {
  func.func @_mlp4_kernel(%arg0: i32, %arg1: memref<16x32xf32, #tpu.memory_space<vmem>>, %arg2: memref<3x32x32xf32, #tpu.memory_space<vmem>>, %arg3: memref<3x1x32xf32, #tpu.memory_space<vmem>>, %arg4: memref<32x128xf32, #tpu.memory_space<vmem>>, %arg5: memref<1x128xf32, #tpu.memory_space<vmem>>, %arg6: memref<16x128xf32, #tpu.memory_space<vmem>>) attributes {dimension_semantics = [#tpu.dimension_semantics<arbitrary>], iteration_bounds = array<i64: 1>, scalar_prefetch = 0 : i64, scratch_operands = 0 : i64, tpu.core_type = #tpu.core_type<tc>, window_params = [{transform_indices = @transform_0, window_bounds = array<i64: 16, 32>}, {pipeline_mode = #tpu.pipeline_mode<synchronous>, transform_indices = @transform_1, window_bounds = array<i64: 3, 32, 32>}, {pipeline_mode = #tpu.pipeline_mode<synchronous>, transform_indices = @transform_2, window_bounds = array<i64: 3, 1, 32>}, {pipeline_mode = #tpu.pipeline_mode<synchronous>, transform_indices = @transform_3, window_bounds = array<i64: 32, 128>}, {pipeline_mode = #tpu.pipeline_mode<synchronous>, transform_indices = @transform_4, window_bounds = array<i64: 1, 128>}, {transform_indices = @transform_5, window_bounds = array<i64: 16, 128>}]} {
    %c0 = arith.constant 0 : index
    %c0_0 = arith.constant 0 : index
    %0 = vector.load %arg1[%c0, %c0_0] : memref<16x32xf32, #tpu.memory_space<vmem>>, vector<16x32xf32>
    %c0_1 = arith.constant 0 : index
    %c0_2 = arith.constant 0 : index
    %c0_3 = arith.constant 0 : index
    %1 = vector.load %arg2[%c0_1, %c0_2, %c0_3] : memref<3x32x32xf32, #tpu.memory_space<vmem>>, vector<1x32x32xf32>
    %2 = vector.shape_cast %1 : vector<1x32x32xf32> to vector<32x32xf32>
    %cst = arith.constant dense<0.000000e+00> : vector<16x32xf32>
    %3 = tpu.matmul %0, %2, %cst {dimension_numbers = #tpu.dot_dimension_numbers<[1], [0], [0], [1], [0, 0, 1, 1], [], []>} : vector<16x32xf32>, vector<32x32xf32>, vector<16x32xf32> -> vector<16x32xf32>
    %c0_4 = arith.constant 0 : index
    %c0_5 = arith.constant 0 : index
    %c0_6 = arith.constant 0 : index
    %4 = vector.load %arg3[%c0_4, %c0_5, %c0_6] : memref<3x1x32xf32, #tpu.memory_space<vmem>>, vector<1x1x32xf32>
    %5 = vector.shape_cast %4 : vector<1x1x32xf32> to vector<1x32xf32>
    %6 = vector.broadcast %5 : vector<1x32xf32> to vector<16x32xf32>
    %7 = arith.addf %3, %6 : vector<16x32xf32>
    %cst_7 = arith.constant 0.000000e+00 : f32
    %8 = vector.broadcast %cst_7 : f32 to vector<16x32xf32>
    %9 = arith.maximumf %7, %8 : vector<16x32xf32>
    %c1 = arith.constant 1 : index
    %c0_8 = arith.constant 0 : index
    %c0_9 = arith.constant 0 : index
    %10 = vector.load %arg2[%c1, %c0_8, %c0_9] : memref<3x32x32xf32, #tpu.memory_space<vmem>>, vector<1x32x32xf32>
    %11 = vector.shape_cast %10 : vector<1x32x32xf32> to vector<32x32xf32>
    %cst_10 = arith.constant dense<0.000000e+00> : vector<16x32xf32>
    %12 = tpu.matmul %9, %11, %cst_10 {dimension_numbers = #tpu.dot_dimension_numbers<[1], [0], [0], [1], [0, 0, 1, 1], [], []>} : vector<16x32xf32>, vector<32x32xf32>, vector<16x32xf32> -> vector<16x32xf32>
    %c1_11 = arith.constant 1 : index
    %c0_12 = arith.constant 0 : index
    %c0_13 = arith.constant 0 : index
    %13 = vector.load %arg3[%c1_11, %c0_12, %c0_13] : memref<3x1x32xf32, #tpu.memory_space<vmem>>, vector<1x1x32xf32>
    %14 = vector.shape_cast %13 : vector<1x1x32xf32> to vector<1x32xf32>
    %15 = vector.broadcast %14 : vector<1x32xf32> to vector<16x32xf32>
    %16 = arith.addf %12, %15 : vector<16x32xf32>
    %cst_14 = arith.constant 0.000000e+00 : f32
    %17 = vector.broadcast %cst_14 : f32 to vector<16x32xf32>
    %18 = arith.maximumf %16, %17 : vector<16x32xf32>
    %c2 = arith.constant 2 : index
    %c0_15 = arith.constant 0 : index
    %c0_16 = arith.constant 0 : index
    %19 = vector.load %arg2[%c2, %c0_15, %c0_16] : memref<3x32x32xf32, #tpu.memory_space<vmem>>, vector<1x32x32xf32>
    %20 = vector.shape_cast %19 : vector<1x32x32xf32> to vector<32x32xf32>
    %cst_17 = arith.constant dense<0.000000e+00> : vector<16x32xf32>
    %21 = tpu.matmul %18, %20, %cst_17 {dimension_numbers = #tpu.dot_dimension_numbers<[1], [0], [0], [1], [0, 0, 1, 1], [], []>} : vector<16x32xf32>, vector<32x32xf32>, vector<16x32xf32> -> vector<16x32xf32>
    %c2_18 = arith.constant 2 : index
    %c0_19 = arith.constant 0 : index
    %c0_20 = arith.constant 0 : index
    %22 = vector.load %arg3[%c2_18, %c0_19, %c0_20] : memref<3x1x32xf32, #tpu.memory_space<vmem>>, vector<1x1x32xf32>
    %23 = vector.shape_cast %22 : vector<1x1x32xf32> to vector<1x32xf32>
    %24 = vector.broadcast %23 : vector<1x32xf32> to vector<16x32xf32>
    %25 = arith.addf %21, %24 : vector<16x32xf32>
    %cst_21 = arith.constant 0.000000e+00 : f32
    %26 = vector.broadcast %cst_21 : f32 to vector<16x32xf32>
    %27 = arith.maximumf %25, %26 : vector<16x32xf32>
    %c0_22 = arith.constant 0 : index
    %c0_23 = arith.constant 0 : index
    %28 = vector.load %arg4[%c0_22, %c0_23] : memref<32x128xf32, #tpu.memory_space<vmem>>, vector<32x128xf32>
    %cst_24 = arith.constant dense<0.000000e+00> : vector<16x128xf32>
    %29 = tpu.matmul %27, %28, %cst_24 {dimension_numbers = #tpu.dot_dimension_numbers<[1], [0], [0], [1], [0, 0, 1, 1], [], []>} : vector<16x32xf32>, vector<32x128xf32>, vector<16x128xf32> -> vector<16x128xf32>
    %c0_25 = arith.constant 0 : index
    %c0_26 = arith.constant 0 : index
    %30 = vector.load %arg5[%c0_25, %c0_26] : memref<1x128xf32, #tpu.memory_space<vmem>>, vector<1x128xf32>
    %31 = vector.broadcast %30 : vector<1x128xf32> to vector<16x128xf32>
    %32 = arith.addf %29, %31 : vector<16x128xf32>
    %c0_27 = arith.constant 0 : index
    %c0_28 = arith.constant 0 : index
    %33 = vector.load %arg6[%c0_27, %c0_28] : memref<16x128xf32, #tpu.memory_space<vmem>>, vector<16x128xf32>
    tpu.vector_store %arg6[%c0_27, %c0_28], %32 {strides = array<i32>} : memref<16x128xf32, #tpu.memory_space<vmem>>, vector<16x128xf32>,
    return
  }
  func.func @transform_0(%arg0: i32) -> (i32, i32) {
    %c0_i32 = arith.constant 0 : i32
    %c0_i32_0 = arith.constant 0 : i32
    return %arg0, %c0_i32 : i32, i32
  }
  func.func @transform_1(%arg0: i32) -> (i32, i32, i32) {
    %c0_i32 = arith.constant 0 : i32
    %c0_i32_0 = arith.constant 0 : i32
    %c0_i32_1 = arith.constant 0 : i32
    %c0_i32_2 = arith.constant 0 : i32
    return %c0_i32, %c0_i32_0, %c0_i32_1 : i32, i32, i32
  }
  func.func @transform_2(%arg0: i32) -> (i32, i32, i32) {
    %c0_i32 = arith.constant 0 : i32
    %c0_i32_0 = arith.constant 0 : i32
    %c0_i32_1 = arith.constant 0 : i32
    %c0_i32_2 = arith.constant 0 : i32
    return %c0_i32, %c0_i32_0, %c0_i32_1 : i32, i32, i32
  }
  func.func @transform_3(%arg0: i32) -> (i32, i32) {
    %c0_i32 = arith.constant 0 : i32
    %c0_i32_0 = arith.constant 0 : i32
    %c0_i32_1 = arith.constant 0 : i32
    return %c0_i32, %c0_i32_0 : i32, i32
  }
  func.func @transform_4(%arg0: i32) -> (i32, i32) {
    %c0_i32 = arith.constant 0 : i32
    %c0_i32_0 = arith.constant 0 : i32
    %c0_i32_1 = arith.constant 0 : i32
    return %c0_i32, %c0_i32_0 : i32, i32
  }
  func.func @transform_5(%arg0: i32) -> (i32, i32) {
    %c0_i32 = arith.constant 0 : i32
    %c0_i32_0 = arith.constant 0 : i32
    return %arg0, %c0_i32 : i32, i32
  }
}

</mosaic_0001>

<llo_original>
// kernel: _mlp4_forward.1
$region0: #{_mlp4_forward.1}
  #allocation0 [shape = 'u32[]', space=smem, size = 0x4, offset = 0x4, fixed_abs, tag = 'smem constant byte address 0x4 - core index']
  #allocation1 [shape = 'u32[144,128]{1,0:T(1,128)}', space=vmem, size = 0x12000, scoped, tag = 'internal scratch']
  %s0 = inlined_call_operand.hbm [shape: f32[16,32], index: 0, kind: input, shape index: {}]
  %s1 = inlined_call_operand.hbm [shape: f32[3,32,32], index: 1, kind: input, shape index: {}]
  %s2 = inlined_call_operand.vmem [shape: f32[3,1,32], index: 2, kind: input, shape index: {}]
  %s3 = inlined_call_operand.hbm [shape: f32[32,128], index: 3, kind: input, shape index: {}]
  %s4 = inlined_call_operand.vmem [shape: f32[1,128], index: 4, kind: input, shape index: {}]
  %s5 = inlined_call_operand.vmem [shape: f32[16,128], index: 5, kind: output, shape index: {}]
  %s6 = sld [smem:[#allocation0]]
  $region42: #{_mlp4_forward.1} parent=0
    _
  %s8 = ssub.s32 1, %s6
  %s9 = scalar_select 0, %s8, %s6
  $region1: #{_mlp4_forward.1} parent=0
    #allocation2 [shape = 'u8[8192]{0}', space=vmem, size = 0x2000, scoped, tag = 'input window, operand 0, single buffered']
    #allocation3 [shape = 's32[1]{0}', space=sflag, size = 0x4, scoped, tag = 'scoped memory for _mlp4_forward.1']
    #allocation4 [shape = 'u8[49152]{0}', space=vmem, size = 0xc000, scoped, tag = 'input window, operand 1, single buffered']
    #allocation5 [shape = 's32[1]{0}', space=sflag, size = 0x4, scoped, tag = 'scoped memory for _mlp4_forward.1']
    #allocation6 [shape = 'u8[16384]{0}', space=vmem, size = 0x4000, scoped, tag = 'input window, operand 3, single buffered']
    %10 = vsyncpa [#allocation3], 0
    %11 = vsyncpa [#allocation5], 0
    // Predicated region
    $region2: #{_mlp4_forward.1} parent=1 // pred_check
      _
    $region3: #{_mlp4_forward.1} parent=1 // pred_check_branch
      %13 = sbr.rel (0) target = $region5
    $region4: #{_mlp4_forward.1} parent=1 // pred_region
      %s15 = ssub.s32 256, 256
      %16 = vsyncadd [#allocation3], %s15
      %s17 = sshll.u32 [#allocation2], 4
      %s18 = int_to_ptr.vmem [resolvable:$true] %s17
      %23 = dma.hbm_to_vmem [thread:$0]  %s0, 256, %s18, [#allocation3], 128, 128, 8
    $region5: #{_mlp4_forward.1} parent=1 // pred_fallthru
      _
    // Predicated region
    $region6: #{_mlp4_forward.1} parent=1 // pred_check
      _
    $region7: #{_mlp4_forward.1} parent=1 // pred_check_branch
      %25 = sbr.rel (0) target = $region9
    $region8: #{_mlp4_forward.1} parent=1 // pred_region
      %s27 = ssub.s32 1536, 1536
      %28 = vsyncadd [#allocation5], %s27
      %s29 = sshll.u32 [#allocation4], 4
      %s30 = int_to_ptr.vmem [resolvable:$true] %s29
      %35 = dma.hbm_to_vmem [thread:$0]  %s1, 1536, %s30, [#allocation5], 128, 128, 8
    $region9: #{_mlp4_forward.1} parent=1 // pred_fallthru
      _
    // Predicated region
    $region10: #{_mlp4_forward.1} parent=1 // pred_check
      _
    $region11: #{_mlp4_forward.1} parent=1 // pred_check_branch
      %37 = sbr.rel (0) target = $region13
    $region12: #{_mlp4_forward.1} parent=1 // pred_region
      _
    $region13: #{_mlp4_forward.1} parent=1 // pred_fallthru
      _
    // Predicated region
    $region14: #{_mlp4_forward.1} parent=1 // pred_check
      _
    $region15: #{_mlp4_forward.1} parent=1 // pred_check_branch
      %39 = sbr.rel (0) target = $region17
    $region16: #{_mlp4_forward.1} parent=1 // pred_region
      %s41 = ssub.s32 512, 512
      %42 = vsyncadd [#allocation5], %s41
      %s43 = sshll.u32 [#allocation6], 4
      %s44 = int_to_ptr.vmem [resolvable:$true] %s43
      %49 = dma.hbm_to_vmem [thread:$0]  %s3, 512, %s44, [#allocation5], 128, 128, 8
    $region17: #{_mlp4_forward.1} parent=1 // pred_fallthru
      _
    // Predicated region
    $region18: #{_mlp4_forward.1} parent=1 // pred_check
      _
    $region19: #{_mlp4_forward.1} parent=1 // pred_check_branch
      %51 = sbr.rel (0) target = $region21
    $region20: #{_mlp4_forward.1} parent=1 // pred_region
      _
    $region21: #{_mlp4_forward.1} parent=1 // pred_fallthru
      _
    // Predicated region
    $region22: #{_mlp4_forward.1} parent=1 // pred_check
      _
    $region23: #{_mlp4_forward.1} parent=1 // pred_check_branch
      %53 = sbr.rel (0) target = $region25
    $region24: #{_mlp4_forward.1} parent=1 // pred_region
      %54 = dma.done [#allocation3], 256
    $region25: #{_mlp4_forward.1} parent=1 // pred_fallthru
      _
    // Predicated region
    $region26: #{_mlp4_forward.1} parent=1 // pred_check
      _
    $region27: #{_mlp4_forward.1} parent=1 // pred_check_branch
      %56 = sbr.rel (0) target = $region29
    $region28: #{_mlp4_forward.1} parent=1 // pred_region
      %57 = dma.done [#allocation5], 1536
    $region29: #{_mlp4_forward.1} parent=1 // pred_fallthru
      _
    // Predicated region
    $region30: #{_mlp4_forward.1} parent=1 // pred_check
      _
    $region31: #{_mlp4_forward.1} parent=1 // pred_check_branch
      %59 = sbr.rel (0) target = $region33
    $region32: #{_mlp4_forward.1} parent=1 // pred_region
      %60 = dma.done [#allocation5], 512
    $region33: #{_mlp4_forward.1} parent=1 // pred_fallthru
      _
    %v61 = vld [vmem:[#allocation2] sm:$0xff]
    %v62 = vld [vmem:[#allocation2 + $0x8] sm:$0xff]
    %v63 = vld [vmem:[#allocation4] sm:$0xff]
    %v64 = vld [vmem:[#allocation4 + $0x8] sm:$0xff]
    %v65 = vld [vmem:[#allocation4 + $0x10] sm:$0xff]
    %v66 = vld [vmem:[#allocation4 + $0x18] sm:$0xff]
    %v67 = vld [vmem:[%s2] sm:$0x1]
    %v69 = vlaneseq
    %v70 = vshrl.u32 %v69, 7
    %v71 = vsub.s32 0, %v70
    %v72 = vrot.slane %v67, %v71
    %vm74 = vcmask 261120
    %v76 = vsel %vm74, %v61, 0
    %v79 = vsel %vm74, %v62, 0
    %81 = vmatprep.subr.mxu0 0.0
    %82 = vmatpush1.msra.mxu0 %v63
    %83 = vmatprep.subr.mxu0 0.0
    %84 = vmatpush1.msra.mxu0 %v64
    %85 = vmatprep.subr.mxu0 0.0
    %86 = vmatpush1.msra.mxu0 %v65
    %87 = vmatprep.subr.mxu0 0.0
    %88 = vmatpush1.msra.mxu0 %v66
    %89 = vmatprep.subr.mxu0 0.0
    %90 = vmatpush1.msra.mxu0 0.0
    %91 = vmatprep.subr.mxu0 0.0
    %92 = vmatpush1.msra.mxu0 0.0
    %93 = vmatprep.subr.mxu0 0.0
    %94 = vmatpush1.msra.mxu0 0.0
    %95 = vmatprep.subr.mxu0 0.0
    %96 = vmatpush1.msra.mxu0 0.0
    %97 = vmatprep.subr.mxu0 0.0
    %98 = vmatpush1.msra.mxu0 0.0
    %99 = vmatprep.subr.mxu0 0.0
    %100 = vmatpush1.msra.mxu0 0.0
    %101 = vmatprep.subr.mxu0 0.0
    %102 = vmatpush1.msra.mxu0 0.0
    %103 = vmatprep.subr.mxu0 0.0
    %104 = vmatpush1.msra.mxu0 0.0
    %105 = vmatprep.subr.mxu0 0.0
    %106 = vmatpush1.msra.mxu0 0.0
    %107 = vmatprep.subr.mxu0 0.0
    %108 = vmatpush1.msra.mxu0 0.0
    %109 = vmatprep.subr.mxu0 0.0
    %110 = vmatpush1.msra.mxu0 0.0
    %111 = vmatprep.subr.mxu0 0.0
    %112 = vmatpush1.msra.mxu0 0.0
    %113 = vmatprep.subr.mxu0 0.0
    %114 = vmatpush1.msra.mxu0 0.0
    %115 = vmatprep.subr.mxu0 0.0
    %116 = vmatpush1.msra.mxu0 0.0
    %117 = vmatprep.subr.mxu0 0.0
    %118 = vmatpush1.msra.mxu0 0.0
    %119 = vmatprep.subr.mxu0 0.0
    %120 = vmatpush1.msra.mxu0 0.0
    %121 = vmatprep.subr.mxu0 0.0
    %122 = vmatpush1.msra.mxu0 0.0
    %123 = vmatprep.subr.mxu0 0.0
    %124 = vmatpush1.msra.mxu0 0.0
    %125 = vmatprep.subr.mxu0 0.0
    %126 = vmatpush1.msra.mxu0 0.0
    %127 = vmatprep.subr.mxu0 0.0
    %128 = vmatpush1.msra.mxu0 0.0
    %129 = vmatprep.subr.mxu0 0.0
    %130 = vmatpush1.msra.mxu0 0.0
    %131 = vmatprep.subr.mxu0 0.0
    %132 = vmatpush1.msra.mxu0 0.0
    %133 = vmatprep.subr.mxu0 0.0
    %134 = vmatpush1.msra.mxu0 0.0
    %135 = vmatprep.subr.mxu0 0.0
    %136 = vmatpush1.msra.mxu0 0.0
    %137 = vmatprep.subr.mxu0 0.0
    %138 = vmatpush1.msra.mxu0 0.0
    %139 = vmatprep.subr.mxu0 0.0
    %140 = vmatpush1.msra.mxu0 0.0
    %141 = vmatprep.subr.mxu0 0.0
    %142 = vmatpush1.msra.mxu0 0.0
    %143 = vmatprep.subr.mxu0 0.0
    %144 = vmatpush1.msra.mxu0 0.0
    %145 = vmatprep.mubr.f32.mxu0 0.0
    %146 = vmatmul.mubr.f32.gmra.mrb[0].mxu0 %v76
    %v147 = vpop.f32.mrb[0].mxu0
    %v148 = vadd.f32 %v72, %v147
    %v149 = vpop.f32.mrb[0].mxu0
    %150 = vmatprep.mubr.f32.mxu0 0.0
    %151 = vmatmul.mubr.f32.gmra.mrb[0].mxu0 %v79
    %v152 = vpop.f32.mrb[0].mxu0
    %v153 = vadd.f32 %v72, %v152
    %v154 = vpop.f32.mrb[0].mxu0
    %155 = vdwg.mxu0
    %v156 = vmax.f32 %v148, 0.0
    %v157 = vmax.f32 %v153, 0.0
    %s158 = scalar_lea.vmem [#allocation4], 32
    %v159 = vld [vmem:[%s158] sm:$0xff]
    %v160 = vld [vmem:[%s158 + $0x8] sm:$0xff]
    %v161 = vld [vmem:[%s158 + $0x10] sm:$0xff]
    %v162 = vld [vmem:[%s158 + $0x18] sm:$0xff]
    %s163 = scalar_lea.vmem %s2, 1
    %v164 = vld [vmem:[%s163] sm:$0x1]
    %v166 = vlaneseq
    %v167 = vshrl.u32 %v166, 7
    %v168 = vsub.s32 0, %v167
    %v169 = vrot.slane %v164, %v168
    %v172 = vsel %vm74, %v156, 0
    %v175 = vsel %vm74, %v157, 0
    %177 = vmatprep.subr.mxu0 0.0
    %178 = vmatpush1.msra.mxu0 %v159
    %179 = vmatprep.subr.mxu0 0.0
    %180 = vmatpush1.msra.mxu0 %v160
    %181 = vmatprep.subr.mxu0 0.0
    %182 = vmatpush1.msra.mxu0 %v161
    %183 = vmatprep.subr.mxu0 0.0
    %184 = vmatpush1.msra.mxu0 %v162
    %185 = vmatprep.subr.mxu0 0.0
    %186 = vmatpush1.msra.mxu0 0.0
    %187 = vmatprep.subr.mxu0 0.0
    %188 = vmatpush1.msra.mxu0 0.0
    %189 = vmatprep.subr.mxu0 0.0
    %190 = vmatpush1.msra.mxu0 0.0
    %191 = vmatprep.subr.mxu0 0.0
    %192 = vmatpush1.msra.mxu0 0.0
    %193 = vmatprep.subr.mxu0 0.0
    %194 = vmatpush1.msra.mxu0 0.0
    %195 = vmatprep.subr.mxu0 0.0
    %196 = vmatpush1.msra.mxu0 0.0
    %197 = vmatprep.subr.mxu0 0.0
    %198 = vmatpush1.msra.mxu0 0.0
    %199 = vmatprep.subr.mxu0 0.0
    %200 = vmatpush1.msra.mxu0 0.0
    %201 = vmatprep.subr.mxu0 0.0
    %202 = vmatpush1.msra.mxu0 0.0
    %203 = vmatprep.subr.mxu0 0.0
    %204 = vmatpush1.msra.mxu0 0.0
    %205 = vmatprep.subr.mxu0 0.0
    %206 = vmatpush1.msra.mxu0 0.0
    %207 = vmatprep.subr.mxu0 0.0
    %208 = vmatpush1.msra.mxu0 0.0
    %209 = vmatprep.subr.mxu0 0.0
    %210 = vmatpush1.msra.mxu0 0.0
    %211 = vmatprep.subr.mxu0 0.0
    %212 = vmatpush1.msra.mxu0 0.0
    %213 = vmatprep.subr.mxu0 0.0
    %214 = vmatpush1.msra.mxu0 0.0
    %215 = vmatprep.subr.mxu0 0.0
    %216 = vmatpush1.msra.mxu0 0.0
    %217 = vmatprep.subr.mxu0 0.0
    %218 = vmatpush1.msra.mxu0 0.0
    %219 = vmatprep.subr.mxu0 0.0
    %220 = vmatpush1.msra.mxu0 0.0
    %221 = vmatprep.subr.mxu0 0.0
    %222 = vmatpush1.msra.mxu0 0.0
    %223 = vmatprep.subr.mxu0 0.0
    %224 = vmatpush1.msra.mxu0 0.0
    %225 = vmatprep.subr.mxu0 0.0
    %226 = vmatpush1.msra.mxu0 0.0
    %227 = vmatprep.subr.mxu0 0.0
    %228 = vmatpush1.msra.mxu0 0.0
    %229 = vmatprep.subr.mxu0 0.0
    %230 = vmatpush1.msra.mxu0 0.0
    %231 = vmatprep.subr.mxu0 0.0
    %232 = vmatpush1.msra.mxu0 0.0
    %233 = vmatprep.subr.mxu0 0.0
    %234 = vmatpush1.msra.mxu0 0.0
    %235 = vmatprep.subr.mxu0 0.0
    %236 = vmatpush1.msra.mxu0 0.0
    %237 = vmatprep.subr.mxu0 0.0
    %238 = vmatpush1.msra.mxu0 0.0
    %239 = vmatprep.subr.mxu0 0.0
    %240 = vmatpush1.msra.mxu0 0.0
    %241 = vmatprep.mubr.f32.mxu0 0.0
    %242 = vmatmul.mubr.f32.gmra.mrb[0].mxu0 %v172
    %v243 = vpop.f32.mrb[0].mxu0
    %v244 = vadd.f32 %v169, %v243
    %v245 = vpop.f32.mrb[0].mxu0
    %246 = vmatprep.mubr.f32.mxu0 0.0
    %247 = vmatmul.mubr.f32.gmra.mrb[0].mxu0 %v175
    %v248 = vpop.f32.mrb[0].mxu0
    %v249 = vadd.f32 %v169, %v248
    %v250 = vpop.f32.mrb[0].mxu0
    %251 = vdwg.mxu0
    %v252 = vmax.f32 %v244, 0.0
    %v253 = vmax.f32 %v249, 0.0
    %s254 = scalar_lea.vmem [#allocation4], 64
    %v255 = vld [vmem:[%s254] sm:$0xff]
    %v256 = vld [vmem:[%s254 + $0x8] sm:$0xff]
    %v257 = vld [vmem:[%s254 + $0x10] sm:$0xff]
    %v258 = vld [vmem:[%s254 + $0x18] sm:$0xff]
    %s259 = scalar_lea.vmem %s2, 2
    %v260 = vld [vmem:[%s259] sm:$0x1]
    %v262 = vlaneseq
    %v263 = vshrl.u32 %v262, 7
    %v264 = vsub.s32 0, %v263
    %v265 = vrot.slane %v260, %v264
    %v268 = vsel %vm74, %v252, 0
    %v271 = vsel %vm74, %v253, 0
    %273 = vmatprep.subr.mxu0 0.0
    %274 = vmatpush1.msra.mxu0 %v255
    %275 = vmatprep.subr.mxu0 0.0
    %276 = vmatpush1.msra.mxu0 %v256
    %277 = vmatprep.subr.mxu0 0.0
    %278 = vmatpush1.msra.mxu0 %v257
    %279 = vmatprep.subr.mxu0 0.0
    %280 = vmatpush1.msra.mxu0 %v258
    %281 = vmatprep.subr.mxu0 0.0
    %282 = vmatpush1.msra.mxu0 0.0
    %283 = vmatprep.subr.mxu0 0.0
    %284 = vmatpush1.msra.mxu0 0.0
    %285 = vmatprep.subr.mxu0 0.0
    %286 = vmatpush1.msra.mxu0 0.0
    %287 = vmatprep.subr.mxu0 0.0
    %288 = vmatpush1.msra.mxu0 0.0
    %289 = vmatprep.subr.mxu0 0.0
    %290 = vmatpush1.msra.mxu0 0.0
    %291 = vmatprep.subr.mxu0 0.0
    %292 = vmatpush1.msra.mxu0 0.0
    %293 = vmatprep.subr.mxu0 0.0
    %294 = vmatpush1.msra.mxu0 0.0
    %295 = vmatprep.subr.mxu0 0.0
    %296 = vmatpush1.msra.mxu0 0.0
    %297 = vmatprep.subr.mxu0 0.0
    %298 = vmatpush1.msra.mxu0 0.0
    %299 = vmatprep.subr.mxu0 0.0
    %300 = vmatpush1.msra.mxu0 0.0
    %301 = vmatprep.subr.mxu0 0.0
    %302 = vmatpush1.msra.mxu0 0.0
    %303 = vmatprep.subr.mxu0 0.0
    %304 = vmatpush1.msra.mxu0 0.0
    %305 = vmatprep.subr.mxu0 0.0
    %306 = vmatpush1.msra.mxu0 0.0
    %307 = vmatprep.subr.mxu0 0.0
    %308 = vmatpush1.msra.mxu0 0.0
    %309 = vmatprep.subr.mxu0 0.0
    %310 = vmatpush1.msra.mxu0 0.0
    %311 = vmatprep.subr.mxu0 0.0
    %312 = vmatpush1.msra.mxu0 0.0
    %313 = vmatprep.subr.mxu0 0.0
    %314 = vmatpush1.msra.mxu0 0.0
    %315 = vmatprep.subr.mxu0 0.0
    %316 = vmatpush1.msra.mxu0 0.0
    %317 = vmatprep.subr.mxu0 0.0
    %318 = vmatpush1.msra.mxu0 0.0
    %319 = vmatprep.subr.mxu0 0.0
    %320 = vmatpush1.msra.mxu0 0.0
    %321 = vmatprep.subr.mxu0 0.0
    %322 = vmatpush1.msra.mxu0 0.0
    %323 = vmatprep.subr.mxu0 0.0
    %324 = vmatpush1.msra.mxu0 0.0
    %325 = vmatprep.subr.mxu0 0.0
    %326 = vmatpush1.msra.mxu0 0.0
    %327 = vmatprep.subr.mxu0 0.0
    %328 = vmatpush1.msra.mxu0 0.0
    %329 = vmatprep.subr.mxu0 0.0
    %330 = vmatpush1.msra.mxu0 0.0
    %331 = vmatprep.subr.mxu0 0.0
    %332 = vmatpush1.msra.mxu0 0.0
    %333 = vmatprep.subr.mxu0 0.0
    %334 = vmatpush1.msra.mxu0 0.0
    %335 = vmatprep.subr.mxu0 0.0
    %336 = vmatpush1.msra.mxu0 0.0
    %337 = vmatprep.mubr.f32.mxu0 0.0
    %338 = vmatmul.mubr.f32.gmra.mrb[0].mxu0 %v268
    %v339 = vpop.f32.mrb[0].mxu0
    %v340 = vadd.f32 %v265, %v339
    %v341 = vpop.f32.mrb[0].mxu0
    %342 = vmatprep.mubr.f32.mxu0 0.0
    %343 = vmatmul.mubr.f32.gmra.mrb[0].mxu0 %v271
    %v344 = vpop.f32.mrb[0].mxu0
    %v345 = vadd.f32 %v265, %v344
    %v346 = vpop.f32.mrb[0].mxu0
    %347 = vdwg.mxu0
    %v348 = vmax.f32 %v340, 0.0
    %v349 = vmax.f32 %v345, 0.0
    %v350 = vld [vmem:[#allocation6] sm:$0xff]
    %v351 = vld [vmem:[#allocation6 + $0x8] sm:$0xff]
    %v352 = vld [vmem:[#allocation6 + $0x10] sm:$0xff]
    %v353 = vld [vmem:[#allocation6 + $0x18] sm:$0xff]
    %v354 = vld [vmem:[%s4] sm:$0x1]
    %v356 = vlaneseq
    %v357 = vshrl.u32 %v356, 7
    %v358 = vsub.s32 0, %v357
    %v359 = vrot.slane %v354, %v358
    %v362 = vsel %vm74, %v348, 0
    %v365 = vsel %vm74, %v349, 0
    %367 = vmatprep.subr.mxu0 0.0
    %368 = vmatpush1.msra.mxu0 %v350
    %369 = vmatprep.subr.mxu0 0.0
    %370 = vmatpush1.msra.mxu0 %v351
    %371 = vmatprep.subr.mxu0 0.0
    %372 = vmatpush1.msra.mxu0 %v352
    %373 = vmatprep.subr.mxu0 0.0
    %374 = vmatpush1.msra.mxu0 %v353
    %375 = vmatprep.subr.mxu0 0.0
    %376 = vmatpush1.msra.mxu0 0.0
    %377 = vmatprep.subr.mxu0 0.0
    %378 = vmatpush1.msra.mxu0 0.0
    %379 = vmatprep.subr.mxu0 0.0
    %380 = vmatpush1.msra.mxu0 0.0
    %381 = vmatprep.subr.mxu0 0.0
    %382 = vmatpush1.msra.mxu0 0.0
    %383 = vmatprep.subr.mxu0 0.0
    %384 = vmatpush1.msra.mxu0 0.0
    %385 = vmatprep.subr.mxu0 0.0
    %386 = vmatpush1.msra.mxu0 0.0
    %387 = vmatprep.subr.mxu0 0.0
    %388 = vmatpush1.msra.mxu0 0.0
    %389 = vmatprep.subr.mxu0 0.0
    %390 = vmatpush1.msra.mxu0 0.0
    %391 = vmatprep.subr.mxu0 0.0
    %392 = vmatpush1.msra.mxu0 0.0
    %393 = vmatprep.subr.mxu0 0.0
    %394 = vmatpush1.msra.mxu0 0.0
    %395 = vmatprep.subr.mxu0 0.0
    %396 = vmatpush1.msra.mxu0 0.0
    %397 = vmatprep.subr.mxu0 0.0
    %398 = vmatpush1.msra.mxu0 0.0
    %399 = vmatprep.subr.mxu0 0.0
    %400 = vmatpush1.msra.mxu0 0.0
    %401 = vmatprep.subr.mxu0 0.0
    %402 = vmatpush1.msra.mxu0 0.0
    %403 = vmatprep.subr.mxu0 0.0
    %404 = vmatpush1.msra.mxu0 0.0
    %405 = vmatprep.subr.mxu0 0.0
    %406 = vmatpush1.msra.mxu0 0.0
    %407 = vmatprep.subr.mxu0 0.0
    %408 = vmatpush1.msra.mxu0 0.0
    %409 = vmatprep.subr.mxu0 0.0
    %410 = vmatpush1.msra.mxu0 0.0
    %411 = vmatprep.subr.mxu0 0.0
    %412 = vmatpush1.msra.mxu0 0.0
    %413 = vmatprep.subr.mxu0 0.0
    %414 = vmatpush1.msra.mxu0 0.0
    %415 = vmatprep.subr.mxu0 0.0
    %416 = vmatpush1.msra.mxu0 0.0
    %417 = vmatprep.subr.mxu0 0.0
    %418 = vmatpush1.msra.mxu0 0.0
    %419 = vmatprep.subr.mxu0 0.0
    %420 = vmatpush1.msra.mxu0 0.0
    %421 = vmatprep.subr.mxu0 0.0
    %422 = vmatpush1.msra.mxu0 0.0
    %423 = vmatprep.subr.mxu0 0.0
    %424 = vmatpush1.msra.mxu0 0.0
    %425 = vmatprep.subr.mxu0 0.0
    %426 = vmatpush1.msra.mxu0 0.0
    %427 = vmatprep.subr.mxu0 0.0
    %428 = vmatpush1.msra.mxu0 0.0
    %429 = vmatprep.subr.mxu0 0.0
    %430 = vmatpush1.msra.mxu0 0.0
    %431 = vmatprep.mubr.f32.mxu0 0.0
    %432 = vmatmul.mubr.f32.gmra.mrb[0].mxu0 %v362
    %v433 = vpop.f32.mrb[0].mxu0
    %v434 = vadd.f32 %v359, %v433
    %v435 = vpop.f32.mrb[0].mxu0
    %436 = vmatprep.mubr.f32.mxu0 0.0
    %437 = vmatmul.mubr.f32.gmra.mrb[0].mxu0 %v365
    %v438 = vpop.f32.mrb[0].mxu0
    %v439 = vadd.f32 %v359, %v438
    %v440 = vpop.f32.mrb[0].mxu0
    %441 = vdwg.mxu0
    %442 = vst [vmem:[%s5] sm:$0xff] %v434
    %443 = vst [vmem:[%s5 + $0x8] sm:$0xff] %v439
    // Predicated region
    $region34: #{_mlp4_forward.1} parent=1 // pred_check
      _
    $region35: #{_mlp4_forward.1} parent=1 // pred_check_branch
      %445 = sbr.rel (0) target = $region37
    $region36: #{_mlp4_forward.1} parent=1 // pred_region
      _
    $region37: #{_mlp4_forward.1} parent=1 // pred_fallthru
      _
    // Predicated region
    $region38: #{_mlp4_forward.1} parent=1 // pred_check
      _
    $region39: #{_mlp4_forward.1} parent=1 // pred_check_branch
      %447 = sbr.rel (0) target = $region41
    $region40: #{_mlp4_forward.1} parent=1 // pred_region
      _
    $region41: #{_mlp4_forward.1} parent=1 // pred_fallthru
      _
    %448 = vsyncpa [#allocation3], 1
    %449 = vsyncpa [#allocation5], 1

</llo_original>
